<compile_context>
chip_gen: v6e
topology: v6e:2x2x1
jax: 0.10.0
libtpu: 0.0.40
codegen_flags: <defaults>
</compile_context>

<pallas_src>
import functools

import jax
import jax.numpy as jnp
from jax.experimental import pallas as pl
from jax.experimental.pallas import tpu as pltpu


def _ffn_kernel(xcat_ref, xres_ref, w1_ref, b1_ref, w2_ref, b2_ref,
                gamma_ref, beta_ref, out_ref, *, eps):
    """One (batch, time-tile) block.

    xcat_ref : (1, Tt, K1*d_in)  bf16   im2col'd zero-padded conv1 input
    xres_ref : (1, Tt, d_in)            original x (residual), aligned read
    w1_ref   : (K1*d_in, d_hid)  bf16   conv1 weight, tap-major flattened
    b1_ref   : (1, d_hid)        f32
    w2_ref   : (d_hid, d_in)     bf16   conv2 weight (kernel_size == 1)
    b2_ref, gamma_ref, beta_ref : (1, d_in) f32
    out_ref  : (1, Tt, d_in)
    """
    # conv1 as a single MXU matmul (bf16 x bf16 -> f32 accumulate); bias folded
    # into the ReLU epilogue.
    h = jnp.dot(xcat_ref[0], w1_ref[...], preferred_element_type=jnp.float32)
    h = jnp.maximum(h + b1_ref[...], 0.0)              # (Tt, d_hid), f32 elementwise
    h = h.astype(jnp.bfloat16)                         # bf16 operand for 2nd matmul

    # conv2 (kernel_size == 1): one matmul + bias.
    o = jnp.dot(h, w2_ref[...], preferred_element_type=jnp.float32)
    o = o + b2_ref[...]                                # (Tt, d_in), f32

    # TODO(synk): dropout is identity in eval mode; training-mode dropout not implemented.

    # residual add + LayerNorm over channels, all f32.
    y = o + xres_ref[0].astype(jnp.float32)
    mu = jnp.mean(y, axis=-1, keepdims=True)
    var = jnp.mean(jnp.square(y - mu), axis=-1, keepdims=True)
    yn = (y - mu) * jax.lax.rsqrt(var + eps)
    out = yn * gamma_ref[...] + beta_ref[...]
    out_ref[0] = out.astype(out_ref.dtype)


def positionwise_feed_forward(x, params, *, k1=9, pad1=4, k2=1, pad2=0,
                              eps=1e-5, t_tile=None):
    """x: (B, T, d_in) channels-last.  Returns (B, T, d_in)."""
    B, T, d_in = x.shape
    w1, b1, w2, b2, gamma, beta = (params[n] for n in
                                   ("w1", "b1", "w2", "b2", "gamma", "beta"))
    d_hid = w1.shape[0]
    assert 2 * pad1 == k1 - 1, "conv1 must be 'same' length"
    # TODO(synk): only the standard FastSpeech second conv (kernel_size=1) is implemented.
    assert k2 == 1 and pad2 == 0, "only fft_conv1d_kernel[1] == 1 is supported"

    if t_tile is None:
        t_tile = 512 if (T > 512 and T % 512 == 0) else T
    assert T % t_tile == 0
    n_t = T // t_tile

    # --- glue (plain JAX): im2col of the conv1 input + weight reshapes, bf16 for the MXU.
    xpad = jnp.pad(x, ((0, 0), (pad1, pad1), (0, 0)))
    x_cat = jnp.concatenate([xpad[:, k:k + T, :] for k in range(k1)],
                            axis=-1).astype(jnp.bfloat16)          # (B, T, K1*d_in)
    # PyTorch Conv1d weight (C_out, C_in, K) -> tap-major flattened (K*C_in, C_out).
    w1_flat = jnp.transpose(w1, (2, 1, 0)).reshape(k1 * d_in, d_hid).astype(jnp.bfloat16)
    w2_mat = jnp.transpose(w2[:, :, 0]).astype(jnp.bfloat16)       # (d_hid, d_in)

    f32 = jnp.float32
    b1r = b1.reshape(1, d_hid).astype(f32)
    b2r = b2.reshape(1, d_in).astype(f32)
    gr = gamma.reshape(1, d_in).astype(f32)
    br = beta.reshape(1, d_in).astype(f32)

    kc = k1 * d_in
    kernel = functools.partial(_ffn_kernel, eps=eps)

    return pl.pallas_call(
        kernel,
        out_shape=jax.ShapeDtypeStruct((B, T, d_in), x.dtype),
        grid_spec=pltpu.PrefetchScalarGridSpec(
            num_scalar_prefetch=0,
            grid=(B, n_t),
            in_specs=[
                pl.BlockSpec((1, t_tile, kc), lambda b, t: (b, t, 0)),     # im2col x
                pl.BlockSpec((1, t_tile, d_in), lambda b, t: (b, t, 0)),   # residual x
                pl.BlockSpec((kc, d_hid), lambda b, t: (0, 0)),            # W1 (flat)
                pl.BlockSpec((1, d_hid), lambda b, t: (0, 0)),             # b1
                pl.BlockSpec((d_hid, d_in), lambda b, t: (0, 0)),          # W2
                pl.BlockSpec((1, d_in), lambda b, t: (0, 0)),              # b2
                pl.BlockSpec((1, d_in), lambda b, t: (0, 0)),              # gamma
                pl.BlockSpec((1, d_in), lambda b, t: (0, 0)),              # beta
            ],
            out_specs=pl.BlockSpec((1, t_tile, d_in), lambda b, t: (b, t, 0)),
        ),
        compiler_params=pltpu.CompilerParams(
            dimension_semantics=("parallel", "parallel"),
            vmem_limit_bytes=48 * 1024 * 1024,
        ),
    )(x_cat, x, w1_flat, b1r, w2_mat, b2r, gr, br)


def _reference(x, params, *, k1, pad1, eps):
    """Pure-JAX f32 reference of the PyTorch forward (eval mode)."""
    w1, b1, w2, b2, gamma, beta = (params[n] for n in
                                   ("w1", "b1", "w2", "b2", "gamma", "beta"))
    B, T, d_in = x.shape
    xpad = jnp.pad(x, ((0, 0), (pad1, pad1), (0, 0)))
    h = b1[None, None, :]
    for k in range(k1):
        h = h + jnp.einsum("btc,hc->bth", xpad[:, k:k + T, :], w1[:, :, k])
    h = jnp.maximum(h, 0.0)
    o = jnp.einsum("bth,oh->bto", h, w2[:, :, 0]) + b2[None, None, :]
    y = o + x
    mu = jnp.mean(y, axis=-1, keepdims=True)
    var = jnp.mean(jnp.square(y - mu), axis=-1, keepdims=True)
    return (y - mu) * jax.lax.rsqrt(var + eps) * gamma + beta


def init_params(key, d_in, d_hid, k1=9, k2=1):
    ks = jax.random.split(key, 4)
    return {
        "w1": 0.05 * jax.random.normal(ks[0], (d_hid, d_in, k1), jnp.float32),
        "b1": 0.05 * jax.random.normal(ks[1], (d_hid,), jnp.float32),
        "w2": 0.05 * jax.random.normal(ks[2], (d_in, d_hid, k2), jnp.float32),
        "b2": 0.05 * jax.random.normal(ks[3], (d_in,), jnp.float32),
        "gamma": jnp.ones((d_in,), jnp.float32),
        "beta": jnp.zeros((d_in,), jnp.float32),
    }


if __name__ == "__main__":
    B, T, d_in, d_hid = 2, 16, 16, 32
    key = jax.random.PRNGKey(0)
    kx, kp = jax.random.split(key)
    x = jax.random.normal(kx, (B, T, d_in), jnp.float32)
    params = init_params(kp, d_in, d_hid)

    out = positionwise_feed_forward(x, params)
    jax.block_until_ready(out)
    assert out.shape == (B, T, d_in)

    # Correctness check vs pure-JAX reference (loose tolerance: bf16 MXU operands).
    ref = _reference(x, params, k1=9, pad1=4, eps=1e-5)
    max_err = float(jnp.max(jnp.abs(out - ref)))
    assert jnp.allclose(out, ref, atol=5e-2, rtol=5e-2), max_err

    print("KERNEL_OK")
</pallas_src>

<mosaic_0001>
module attributes {stable_mosaic.version = 11 : i64} {
  func.func @_ffn_kernel(%arg0: i32, %arg1: i32, %arg2: memref<1x16x144xbf16, #tpu.memory_space<vmem>>, %arg3: memref<1x16x16xf32, #tpu.memory_space<vmem>>, %arg4: memref<144x32xbf16, #tpu.memory_space<vmem>>, %arg5: memref<1x32xf32, #tpu.memory_space<vmem>>, %arg6: memref<32x16xbf16, #tpu.memory_space<vmem>>, %arg7: memref<1x16xf32, #tpu.memory_space<vmem>>, %arg8: memref<1x16xf32, #tpu.memory_space<vmem>>, %arg9: memref<1x16xf32, #tpu.memory_space<vmem>>, %arg10: memref<1x16x16xf32, #tpu.memory_space<vmem>>) attributes {dimension_semantics = [#tpu.dimension_semantics<parallel>, #tpu.dimension_semantics<parallel>], iteration_bounds = array<i64: 2, 1>, scalar_prefetch = 0 : i64, scratch_operands = 0 : i64, tpu.core_type = #tpu.core_type<tc>, window_params = [{transform_indices = @transform_0, window_bounds = array<i64: 1, 16, 144>}, {transform_indices = @transform_1, window_bounds = array<i64: 1, 16, 16>}, {pipeline_mode = #tpu.pipeline_mode<synchronous>, transform_indices = @transform_2, window_bounds = array<i64: 144, 32>}, {pipeline_mode = #tpu.pipeline_mode<synchronous>, transform_indices = @transform_3, window_bounds = array<i64: 1, 32>}, {pipeline_mode = #tpu.pipeline_mode<synchronous>, transform_indices = @transform_4, window_bounds = array<i64: 32, 16>}, {pipeline_mode = #tpu.pipeline_mode<synchronous>, transform_indices = @transform_5, window_bounds = array<i64: 1, 16>}, {pipeline_mode = #tpu.pipeline_mode<synchronous>, transform_indices = @transform_6, window_bounds = array<i64: 1, 16>}, {pipeline_mode = #tpu.pipeline_mode<synchronous>, transform_indices = @transform_7, window_bounds = array<i64: 1, 16>}, {transform_indices = @transform_8, window_bounds = array<i64: 1, 16, 16>}]} {
    %c0 = arith.constant 0 : index
    %c0_0 = arith.constant 0 : index
    %c0_1 = arith.constant 0 : index
    %0 = vector.load %arg2[%c0, %c0_0, %c0_1] : memref<1x16x144xbf16, #tpu.memory_space<vmem>>, vector<1x16x144xbf16>
    %1 = vector.shape_cast %0 : vector<1x16x144xbf16> to vector<16x144xbf16>
    %c0_2 = arith.constant 0 : index
    %c0_3 = arith.constant 0 : index
    %2 = vector.load %arg4[%c0_2, %c0_3] : memref<144x32xbf16, #tpu.memory_space<vmem>>, vector<144x32xbf16>
    %cst = arith.constant dense<0.000000e+00> : vector<16x32xf32>
    %3 = tpu.matmul %1, %2, %cst {dimension_numbers = #tpu.dot_dimension_numbers<[1], [0], [0], [1], [0, 0, 1, 1], [], []>} : vector<16x144xbf16>, vector<144x32xbf16>, vector<16x32xf32> -> vector<16x32xf32>
    %c0_4 = arith.constant 0 : index
    %c0_5 = arith.constant 0 : index
    %4 = vector.load %arg5[%c0_4, %c0_5] : memref<1x32xf32, #tpu.memory_space<vmem>>, vector<1x32xf32>
    %5 = vector.broadcast %4 : vector<1x32xf32> to vector<16x32xf32>
    %6 = arith.addf %3, %5 : vector<16x32xf32>
    %cst_6 = arith.constant 0.000000e+00 : f32
    %7 = vector.broadcast %cst_6 : f32 to vector<16x32xf32>
    %8 = arith.maximumf %6, %7 : vector<16x32xf32>
    %9 = arith.truncf %8 : vector<16x32xf32> to vector<16x32xbf16>
    %c0_7 = arith.constant 0 : index
    %c0_8 = arith.constant 0 : index
    %10 = vector.load %arg6[%c0_7, %c0_8] : memref<32x16xbf16, #tpu.memory_space<vmem>>, vector<32x16xbf16>
    %cst_9 = arith.constant dense<0.000000e+00> : vector<16x16xf32>
    %11 = tpu.matmul %9, %10, %cst_9 {dimension_numbers = #tpu.dot_dimension_numbers<[1], [0], [0], [1], [0, 0, 1, 1], [], []>} : vector<16x32xbf16>, vector<32x16xbf16>, vector<16x16xf32> -> vector<16x16xf32>
    %c0_10 = arith.constant 0 : index
    %c0_11 = arith.constant 0 : index
    %12 = vector.load %arg7[%c0_10, %c0_11] : memref<1x16xf32, #tpu.memory_space<vmem>>, vector<1x16xf32>
    %13 = vector.broadcast %12 : vector<1x16xf32> to vector<16x16xf32>
    %14 = arith.addf %11, %13 : vector<16x16xf32>
    %c0_12 = arith.constant 0 : index
    %c0_13 = arith.constant 0 : index
    %c0_14 = arith.constant 0 : index
    %15 = vector.load %arg3[%c0_12, %c0_13, %c0_14] : memref<1x16x16xf32, #tpu.memory_space<vmem>>, vector<1x16x16xf32>
    %16 = vector.shape_cast %15 : vector<1x16x16xf32> to vector<16x16xf32>
    %17 = arith.addf %14, %16 : vector<16x16xf32>
    %cst_15 = arith.constant dense<0.000000e+00> : vector<16xf32>
    %18 = vector.multi_reduction <add>, %17, %cst_15 [1] : vector<16x16xf32> to vector<16xf32>
    %19 = vector.shape_cast %18 : vector<16xf32> to vector<16x1xf32>
    %cst_16 = arith.constant 1.600000e+01 : f32
    %20 = vector.broadcast %cst_16 : f32 to vector<16x1xf32>
    %21 = arith.divf %19, %20 : vector<16x1xf32>
    %22 = vector.broadcast %21 : vector<16x1xf32> to vector<16x16xf32>
    %23 = arith.subf %17, %22 : vector<16x16xf32>
    %24 = arith.mulf %23, %23 : vector<16x16xf32>
    %cst_17 = arith.constant dense<0.000000e+00> : vector<16xf32>
    %25 = vector.multi_reduction <add>, %24, %cst_17 [1] : vector<16x16xf32> to vector<16xf32>
    %26 = vector.shape_cast %25 : vector<16xf32> to vector<16x1xf32>
    %cst_18 = arith.constant 1.600000e+01 : f32
    %27 = vector.broadcast %cst_18 : f32 to vector<16x1xf32>
    %28 = arith.divf %26, %27 : vector<16x1xf32>
    %29 = vector.broadcast %21 : vector<16x1xf32> to vector<16x16xf32>
    %30 = arith.subf %17, %29 : vector<16x16xf32>
    %cst_19 = arith.constant 9.99999974E-6 : f32
    %31 = vector.broadcast %cst_19 : f32 to vector<16x1xf32>
    %32 = arith.addf %28, %31 : vector<16x1xf32>
    %33 = math.rsqrt %32 : vector<16x1xf32>
    %34 = vector.broadcast %33 : vector<16x1xf32> to vector<16x16xf32>
    %35 = arith.mulf %30, %34 : vector<16x16xf32>
    %c0_20 = arith.constant 0 : index
    %c0_21 = arith.constant 0 : index
    %36 = vector.load %arg8[%c0_20, %c0_21] : memref<1x16xf32, #tpu.memory_space<vmem>>, vector<1x16xf32>
    %37 = vector.broadcast %36 : vector<1x16xf32> to vector<16x16xf32>
    %38 = arith.mulf %35, %37 : vector<16x16xf32>
    %c0_22 = arith.constant 0 : index
    %c0_23 = arith.constant 0 : index
    %39 = vector.load %arg9[%c0_22, %c0_23] : memref<1x16xf32, #tpu.memory_space<vmem>>, vector<1x16xf32>
    %40 = vector.broadcast %39 : vector<1x16xf32> to vector<16x16xf32>
    %41 = arith.addf %38, %40 : vector<16x16xf32>
    %c0_24 = arith.constant 0 : index
    %c0_25 = arith.constant 0 : index
    %c0_26 = arith.constant 0 : index
    %42 = vector.load %arg10[%c0_24, %c0_25, %c0_26] : memref<1x16x16xf32, #tpu.memory_space<vmem>>, vector<1x16x16xf32>
    %43 = vector.shape_cast %42 : vector<1x16x16xf32> to vector<16x16xf32>
    %44 = vector.shape_cast %41 : vector<16x16xf32> to vector<1x16x16xf32>
    tpu.vector_store %arg10[%c0_24, %c0_25, %c0_26], %44 {strides = array<i32>} : memref<1x16x16xf32, #tpu.memory_space<vmem>>, vector<1x16x16xf32>,
    return
  }
  func.func @transform_0(%arg0: i32, %arg1: i32) -> (i32, i32, i32) {
    %c0_i32 = arith.constant 0 : i32
    %c0_i32_0 = arith.constant 0 : i32
    return %arg0, %arg1, %c0_i32 : i32, i32, i32
  }
  func.func @transform_1(%arg0: i32, %arg1: i32) -> (i32, i32, i32) {
    %c0_i32 = arith.constant 0 : i32
    %c0_i32_0 = arith.constant 0 : i32
    return %arg0, %arg1, %c0_i32 : i32, i32, i32
  }
  func.func @transform_2(%arg0: i32, %arg1: i32) -> (i32, i32) {
    %c0_i32 = arith.constant 0 : i32
    %c0_i32_0 = arith.constant 0 : i32
    %c0_i32_1 = arith.constant 0 : i32
    return %c0_i32, %c0_i32_0 : i32, i32
  }
  func.func @transform_3(%arg0: i32, %arg1: i32) -> (i32, i32) {
    %c0_i32 = arith.constant 0 : i32
    %c0_i32_0 = arith.constant 0 : i32
    %c0_i32_1 = arith.constant 0 : i32
    return %c0_i32, %c0_i32_0 : i32, i32
  }
  func.func @transform_4(%arg0: i32, %arg1: i32) -> (i32, i32) {
    %c0_i32 = arith.constant 0 : i32
    %c0_i32_0 = arith.constant 0 : i32
    %c0_i32_1 = arith.constant 0 : i32
    return %c0_i32, %c0_i32_0 : i32, i32
  }
  func.func @transform_5(%arg0: i32, %arg1: i32) -> (i32, i32) {
    %c0_i32 = arith.constant 0 : i32
    %c0_i32_0 = arith.constant 0 : i32
    %c0_i32_1 = arith.constant 0 : i32
    return %c0_i32, %c0_i32_0 : i32, i32
  }
  func.func @transform_6(%arg0: i32, %arg1: i32) -> (i32, i32) {
    %c0_i32 = arith.constant 0 : i32
    %c0_i32_0 = arith.constant 0 : i32
    %c0_i32_1 = arith.constant 0 : i32
    return %c0_i32, %c0_i32_0 : i32, i32
  }
  func.func @transform_7(%arg0: i32, %arg1: i32) -> (i32, i32) {
    %c0_i32 = arith.constant 0 : i32
    %c0_i32_0 = arith.constant 0 : i32
    %c0_i32_1 = arith.constant 0 : i32
    return %c0_i32, %c0_i32_0 : i32, i32
  }
  func.func @transform_8(%arg0: i32, %arg1: i32) -> (i32, i32, i32) {
    %c0_i32 = arith.constant 0 : i32
    %c0_i32_0 = arith.constant 0 : i32
    return %arg0, %arg1, %c0_i32 : i32, i32, i32
  }
}

</mosaic_0001>

<llo_original>
// kernel: tpu_custom_call.1
$region0: #{tpu_custom_call.1}
  #allocation0 [shape = 'u32[]', space=smem, size = 0x4, offset = 0x4, fixed_abs, tag = 'smem constant byte address 0x4 - core index']
  #allocation1 [shape = 'u32[144,128]{1,0:T(1,128)}', space=vmem, size = 0x12000, scoped, tag = 'internal scratch']
  %s0 = inlined_call_operand.vmem [shape: bf16[2,16,144], index: 0, kind: input, shape index: {}]
  %s1 = inlined_call_operand.vmem [shape: f32[2,16,16], index: 1, kind: input, shape index: {}]
  %s2 = inlined_call_operand.vmem [shape: bf16[144,32], index: 2, kind: input, shape index: {}]
  %s3 = inlined_call_operand.vmem [shape: f32[1,32], index: 3, kind: input, shape index: {}]
  %s4 = inlined_call_operand.vmem [shape: bf16[32,16], index: 4, kind: input, shape index: {}]
  %s5 = inlined_call_operand.vmem [shape: f32[1,16], index: 5, kind: input, shape index: {}]
  %s6 = inlined_call_operand.vmem [shape: f32[1,16], index: 6, kind: input, shape index: {}]
  %s7 = inlined_call_operand.vmem [shape: f32[1,16], index: 7, kind: input, shape index: {}]
  %s8 = inlined_call_operand.hbm [shape: f32[2,16,16], index: 8, kind: output, shape index: {}]
  %s9 = sld [smem:[#allocation0]]
  $region65: #{tpu_custom_call.1} parent=0
    _
  %s11 = ssub.s32 1, %s9
  %s12 = scalar_select 0, %s11, %s9
  $region1: #{tpu_custom_call.1} parent=0
    #allocation2 [shape = 'u8[16384]{0}', space=vmem, size = 0x4000, scoped, tag = 'output window, operand 0']
    #allocation3 [shape = 's32[2]{0}', space=sflag, size = 0x8, scoped, tag = 'scoped memory for tpu_custom_call.1']
    %13 = vsyncpa [#allocation3], 0
    %s14 = scalar_lea.sflag [#allocation3], 1
    %15 = vsyncpa %s14, 0
    loop: start=0, step=1, limit=4
    $region2: #{tpu_custom_call.1} parent=1 // loop_pre_header
      _
    $region3: #{tpu_custom_call.1} parent=1 // loop_header
      %s17 = sphi 0, %s21
      %p18 = scmp.ge.s32.totalorder %s17, 4
      %s24 = sphi 0, %s36
      %s25 = sphi 0, %s32
      %s26 = sphi 0, %s24
      %s27 = sphi 0, %s25
      %s28 = sphi 0, %s26
      %s29 = sphi 0, %s27
      %s41 = sphi 0, %s43
      %s44 = sphi 0, %s41
      %s45 = sphi 0, %s44
      %s61 = sphi 0, %s45
      %s69 = sphi 0, %s71
      %s72 = sphi 0, %s69
      %s73 = sphi 0, %s72
      %s89 = sphi 0, %s73
      %s93 = sphi 0, %s93
      %s95 = sphi 0, %s93
      %s96 = sphi 0, %s95
      %s110 = sphi 0, %s96
      %s114 = sphi 0, %s114
      %s116 = sphi 0, %s114
      %s117 = sphi 0, %s116
      %s131 = sphi 0, %s117
      %s135 = sphi 0, %s135
      %s137 = sphi 0, %s135
      %s138 = sphi 0, %s137
      %s152 = sphi 0, %s138
      %s156 = sphi 0, %s156
      %s158 = sphi 0, %s156
      %s159 = sphi 0, %s158
      %s173 = sphi 0, %s159
      %s177 = sphi 0, %s177
      %s179 = sphi 0, %s177
      %s180 = sphi 0, %s179
      %s194 = sphi 0, %s180
      %s198 = sphi 0, %s198
      %s200 = sphi 0, %s198
      %s201 = sphi 0, %s200
      %s215 = sphi 0, %s201
      %s223 = sphi 0, %s225
      %s226 = sphi 0, %s223
      %s227 = sphi 0, %s226
      %s243 = sphi 0, %s227
    $region4: #{tpu_custom_call.1} parent=1 // loop_header_branch
      %20 = sbr.rel (%p18) target = $region8
    $region5: #{tpu_custom_call.1} parent=1 // loop_body
      %s22 = ssub.s32 %s17, 1
      %s23 = ssub.s32 %s17, 2
      %s30 = sadd.s32 1, %s25
      %p31 = scmp.ge.s32.totalorder %s30, 1
      %s32 = scalar_select %p31, 0, %s30
      %s33 = sadd.s32 1, %s24
      %s34 = scalar_select %p31, %s33, %s24
      %p35 = scmp.ge.s32.totalorder %s34, 2
      %s36 = scalar_select %p35, 0, %s34
      %s37 = ssub.s32 %s24, %s36
      %s38 = ssub.s32 %s25, %s32
      %s39 = sor.u32 %s37, %s38
      %p40 = scmp.eq.s32.totalorder %s39, 0
      %s42 = sadd.s32 %s41, 1
      %s43 = scalar_select %p40, %s41, %s42
      %p46 = pneg %p40
      %p47 = scmp.eq.s32.totalorder %s17, 1
      %p48 = por %p46, %p47
      %p49 = scmp.ne.s32.totalorder %s41, %s44
      %p50 = scmp.eq.s32.totalorder %s17, 0
      %p51 = por %p49, %p50
      %p52 = scmp.ne.s32.totalorder %s41, %s44
      %p53 = scmp.eq.s32.totalorder %s22, 1
      %p54 = por %p52, %p53
      %p55 = scmp.ne.s32.totalorder %s44, %s45
      %p56 = scmp.eq.s32.totalorder %s22, 0
      %p57 = por %p55, %p56
      %p58 = scmp.ne.s32.totalorder %s44, %s45
      %p59 = scmp.eq.s32.totalorder %s23, 1
      %p60 = por %p58, %p59
      %p62 = scmp.ne.s32.totalorder %s45, %s61
      %p63 = scmp.eq.s32.totalorder %s23, 0
      %p64 = por %p62, %p63
      %s65 = ssub.s32 %s24, %s36
      %s66 = ssub.s32 %s25, %s32
      %s67 = sor.u32 %s65, %s66
      %p68 = scmp.eq.s32.totalorder %s67, 0
      %s70 = sadd.s32 %s69, 1
      %s71 = scalar_select %p68, %s69, %s70
      %p74 = pneg %p68
      %p75 = scmp.eq.s32.totalorder %s17, 1
      %p76 = por %p74, %p75
      %p77 = scmp.ne.s32.totalorder %s69, %s72
      %p78 = scmp.eq.s32.totalorder %s17, 0
      %p79 = por %p77, %p78
      %p80 = scmp.ne.s32.totalorder %s69, %s72
      %p81 = scmp.eq.s32.totalorder %s22, 1
      %p82 = por %p80, %p81
      %p83 = scmp.ne.s32.totalorder %s72, %s73
      %p84 = scmp.eq.s32.totalorder %s22, 0
      %p85 = por %p83, %p84
      %p86 = scmp.ne.s32.totalorder %s72, %s73
      %p87 = scmp.eq.s32.totalorder %s23, 1
      %p88 = por %p86, %p87
      %p90 = scmp.ne.s32.totalorder %s73, %s89
      %p91 = scmp.eq.s32.totalorder %s23, 0
      %p92 = por %p90, %p91
      %s94 = sadd.s32 %s93, 1
      %p97 = scmp.eq.s32.totalorder %s17, 1
      %p98 = scmp.ne.s32.totalorder %s93, %s95
      %p99 = scmp.eq.s32.totalorder %s17, 0
      %p100 = por %p98, %p99
      %p101 = scmp.ne.s32.totalorder %s93, %s95
      %p102 = scmp.eq.s32.totalorder %s22, 1
      %p103 = por %p101, %p102
      %p104 = scmp.ne.s32.totalorder %s95, %s96
      %p105 = scmp.eq.s32.totalorder %s22, 0
      %p106 = por %p104, %p105
      %p107 = scmp.ne.s32.totalorder %s95, %s96
      %p108 = scmp.eq.s32.totalorder %s23, 1
      %p109 = por %p107, %p108
      %p111 = scmp.ne.s32.totalorder %s96, %s110
      %p112 = scmp.eq.s32.totalorder %s23, 0
      %p113 = por %p111, %p112
      %s115 = sadd.s32 %s114, 1
      %p118 = scmp.eq.s32.totalorder %s17, 1
      %p119 = scmp.ne.s32.totalorder %s114, %s116
      %p120 = scmp.eq.s32.totalorder %s17, 0
      %p121 = por %p119, %p120
      %p122 = scmp.ne.s32.totalorder %s114, %s116
      %p123 = scmp.eq.s32.totalorder %s22, 1
      %p124 = por %p122, %p123
      %p125 = scmp.ne.s32.totalorder %s116, %s117
      %p126 = scmp.eq.s32.totalorder %s22, 0
      %p127 = por %p125, %p126
      %p128 = scmp.ne.s32.totalorder %s116, %s117
      %p129 = scmp.eq.s32.totalorder %s23, 1
      %p130 = por %p128, %p129
      %p132 = scmp.ne.s32.totalorder %s117, %s131
      %p133 = scmp.eq.s32.totalorder %s23, 0
      %p134 = por %p132, %p133
      %s136 = sadd.s32 %s135, 1
      %p139 = scmp.eq.s32.totalorder %s17, 1
      %p140 = scmp.ne.s32.totalorder %s135, %s137
      %p141 = scmp.eq.s32.totalorder %s17, 0
      %p142 = por %p140, %p141
      %p143 = scmp.ne.s32.totalorder %s135, %s137
      %p144 = scmp.eq.s32.totalorder %s22, 1
      %p145 = por %p143, %p144
      %p146 = scmp.ne.s32.totalorder %s137, %s138
      %p147 = scmp.eq.s32.totalorder %s22, 0
      %p148 = por %p146, %p147
      %p149 = scmp.ne.s32.totalorder %s137, %s138
      %p150 = scmp.eq.s32.totalorder %s23, 1
      %p151 = por %p149, %p150
      %p153 = scmp.ne.s32.totalorder %s138, %s152
      %p154 = scmp.eq.s32.totalorder %s23, 0
      %p155 = por %p153, %p154
      %s157 = sadd.s32 %s156, 1
      %p160 = scmp.eq.s32.totalorder %s17, 1
      %p161 = scmp.ne.s32.totalorder %s156, %s158
      %p162 = scmp.eq.s32.totalorder %s17, 0
      %p163 = por %p161, %p162
      %p164 = scmp.ne.s32.totalorder %s156, %s158
      %p165 = scmp.eq.s32.totalorder %s22, 1
      %p166 = por %p164, %p165
      %p167 = scmp.ne.s32.totalorder %s158, %s159
      %p168 = scmp.eq.s32.totalorder %s22, 0
      %p169 = por %p167, %p168
      %p170 = scmp.ne.s32.totalorder %s158, %s159
      %p171 = scmp.eq.s32.totalorder %s23, 1
      %p172 = por %p170, %p171
      %p174 = scmp.ne.s32.totalorder %s159, %s173
      %p175 = scmp.eq.s32.totalorder %s23, 0
      %p176 = por %p174, %p175
      %s178 = sadd.s32 %s177, 1
      %p181 = scmp.eq.s32.totalorder %s17, 1
      %p182 = scmp.ne.s32.totalorder %s177, %s179
      %p183 = scmp.eq.s32.totalorder %s17, 0
      %p184 = por %p182, %p183
      %p185 = scmp.ne.s32.totalorder %s177, %s179
      %p186 = scmp.eq.s32.totalorder %s22, 1
      %p187 = por %p185, %p186
      %p188 = scmp.ne.s32.totalorder %s179, %s180
      %p189 = scmp.eq.s32.totalorder %s22, 0
      %p190 = por %p188, %p189
      %p191 = scmp.ne.s32.totalorder %s179, %s180
      %p192 = scmp.eq.s32.totalorder %s23, 1
      %p193 = por %p191, %p192
      %p195 = scmp.ne.s32.totalorder %s180, %s194
      %p196 = scmp.eq.s32.totalorder %s23, 0
      %p197 = por %p195, %p196
      %s199 = sadd.s32 %s198, 1
      %p202 = scmp.eq.s32.totalorder %s17, 1
      %p203 = scmp.ne.s32.totalorder %s198, %s200
      %p204 = scmp.eq.s32.totalorder %s17, 0
      %p205 = por %p203, %p204
      %p206 = scmp.ne.s32.totalorder %s198, %s200
      %p207 = scmp.eq.s32.totalorder %s22, 1
      %p208 = por %p206, %p207
      %p209 = scmp.ne.s32.totalorder %s200, %s201
      %p210 = scmp.eq.s32.totalorder %s22, 0
      %p211 = por %p209, %p210
      %p212 = scmp.ne.s32.totalorder %s200, %s201
      %p213 = scmp.eq.s32.totalorder %s23, 1
      %p214 = por %p212, %p213
      %p216 = scmp.ne.s32.totalorder %s201, %s215
      %p217 = scmp.eq.s32.totalorder %s23, 0
      %p218 = por %p216, %p217
      %s219 = ssub.s32 %s24, %s36
      %s220 = ssub.s32 %s25, %s32
      %s221 = sor.u32 %s219, %s220
      %p222 = scmp.eq.s32.totalorder %s221, 0
      %s224 = sadd.s32 %s223, 1
      %s225 = scalar_select %p222, %s223, %s224
      %p228 = pneg %p222
      %p229 = scmp.eq.s32.totalorder %s17, 1
      %p230 = por %p228, %p229
      %p231 = scmp.ne.s32.totalorder %s223, %s226
      %p232 = scmp.eq.s32.totalorder %s17, 0
      %p233 = por %p231, %p232
      %p234 = scmp.ne.s32.totalorder %s223, %s226
      %p235 = scmp.eq.s32.totalorder %s22, 1
      %p236 = por %p234, %p235
      %p237 = scmp.ne.s32.totalorder %s226, %s227
      %p238 = scmp.eq.s32.totalorder %s22, 0
      %p239 = por %p237, %p238
      %p240 = scmp.ne.s32.totalorder %s226, %s227
      %p241 = scmp.eq.s32.totalorder %s23, 1
      %p242 = por %p240, %p241
      %p244 = scmp.ne.s32.totalorder %s227, %s243
      %p245 = scmp.eq.s32.totalorder %s23, 0
      %p246 = por %p244, %p245
      %p247 = scmp.le.s32.totalorder 1, %s17
      %p248 = scmp.lt.s32.totalorder %s17, 3
      %p249 = pnand %p247, %p248
      %p250 = pneg %p249
      // Predicated region
      $region9: #{tpu_custom_call.1} parent=5 // pred_check
        _
      $region10: #{tpu_custom_call.1} parent=5 // pred_check_branch
        %252 = sbr.rel (%p249) target = $region12
      $region11: #{tpu_custom_call.1} parent=5 // pred_region
        %s253 = ssub.s32 %s17, 1
        // Predicated region
        $region13: #{tpu_custom_call.1} parent=11 // pred_check
          %p254 = pneg %p106
        $region14: #{tpu_custom_call.1} parent=11 // pred_check_branch
          %256 = sbr.rel (%p254) target = $region16
        $region15: #{tpu_custom_call.1} parent=11 // pred_region
          _
        $region16: #{tpu_custom_call.1} parent=11 // pred_fallthru
          _
        // Predicated region
        $region17: #{tpu_custom_call.1} parent=11 // pred_check
          %p257 = pneg %p127
        $region18: #{tpu_custom_call.1} parent=11 // pred_check_branch
          %259 = sbr.rel (%p257) target = $region20
        $region19: #{tpu_custom_call.1} parent=11 // pred_region
          _
        $region20: #{tpu_custom_call.1} parent=11 // pred_fallthru
          _
        // Predicated region
        $region21: #{tpu_custom_call.1} parent=11 // pred_check
          %p260 = pneg %p148
        $region22: #{tpu_custom_call.1} parent=11 // pred_check_branch
          %262 = sbr.rel (%p260) target = $region24
        $region23: #{tpu_custom_call.1} parent=11 // pred_region
          _
        $region24: #{tpu_custom_call.1} parent=11 // pred_fallthru
          _
        // Predicated region
        $region25: #{tpu_custom_call.1} parent=11 // pred_check
          %p263 = pneg %p169
        $region26: #{tpu_custom_call.1} parent=11 // pred_check_branch
          %265 = sbr.rel (%p263) target = $region28
        $region27: #{tpu_custom_call.1} parent=11 // pred_region
          _
        $region28: #{tpu_custom_call.1} parent=11 // pred_fallthru
          _
        // Predicated region
        $region29: #{tpu_custom_call.1} parent=11 // pred_check
          %p266 = pneg %p190
        $region30: #{tpu_custom_call.1} parent=11 // pred_check_branch
          %268 = sbr.rel (%p266) target = $region32
        $region31: #{tpu_custom_call.1} parent=11 // pred_region
          _
        $region32: #{tpu_custom_call.1} parent=11 // pred_fallthru
          _
        // Predicated region
        $region33: #{tpu_custom_call.1} parent=11 // pred_check
          %p269 = pneg %p211
        $region34: #{tpu_custom_call.1} parent=11 // pred_check_branch
          %271 = sbr.rel (%p269) target = $region36
        $region35: #{tpu_custom_call.1} parent=11 // pred_region
          _
        $region36: #{tpu_custom_call.1} parent=11 // pred_fallthru
          _
      $region12: #{tpu_custom_call.1} parent=5 // pred_fallthru
        _
      %p272 = scmp.lt.s32.totalorder %s17, 2
      // Predicated region
      $region37: #{tpu_custom_call.1} parent=5 // pred_check
        %p273 = pneg %p272
      $region38: #{tpu_custom_call.1} parent=5 // pred_check_branch
        %275 = sbr.rel (%p273) target = $region40
      $region39: #{tpu_custom_call.1} parent=5 // pred_region
        // Predicated region
        $region41: #{tpu_custom_call.1} parent=39 // pred_check
          %p276 = pneg %p51
        $region42: #{tpu_custom_call.1} parent=39 // pred_check_branch
          %278 = sbr.rel (%p276) target = $region44
        $region43: #{tpu_custom_call.1} parent=39 // pred_region
          %s279 = smul.u32 2, %s25
          %p280 = scmp.lt.s32.totalorder %s24, 1
          %s281 = scalar_select %p280, %s24, 1
          %p282 = scmp.lt.s32.totalorder %s279, 1
          %s283 = scalar_select %p282, %s279, 1
          %s284 = smul.addr %s283, 2
          %s285 = smul.addr %s281, 4
          %s286 = sadd.s32 %s284, %s285
          %s287 = smul.addr %s286, 4
          %s288 = scalar_lea.vmem %s0, %s287
          %s289 = smul.u32 2, %s25
        $region44: #{tpu_custom_call.1} parent=39 // pred_fallthru
          _
        // Predicated region
        $region45: #{tpu_custom_call.1} parent=39 // pred_check
          %p290 = pneg %p79
        $region46: #{tpu_custom_call.1} parent=39 // pred_check_branch
          %292 = sbr.rel (%p290) target = $region48
        $region47: #{tpu_custom_call.1} parent=39 // pred_region
          %s293 = smul.u32 2, %s25
          %p294 = scmp.lt.s32.totalorder %s24, 1
          %s295 = scalar_select %p294, %s24, 1
          %p296 = scmp.lt.s32.totalorder %s293, 1
          %s297 = scalar_select %p296, %s293, 1
          %s298 = smul.addr %s295, 2
          %s299 = sadd.s32 %s297, %s298
          %s300 = smul.addr %s299, 8
          %s301 = scalar_lea.vmem %s1, %s300
          %s302 = smul.u32 2, %s25
        $region48: #{tpu_custom_call.1} parent=39 // pred_fallthru
          _
      $region40: #{tpu_custom_call.1} parent=5 // pred_fallthru
        _
      %p303 = scmp.le.s32.totalorder 1, %s17
      %p304 = scmp.lt.s32.totalorder %s17, 3
      %p305 = pnand %p303, %p304
      %p306 = pneg %p305
      // Predicated region
      $region49: #{tpu_custom_call.1} parent=5 // pred_check
        _
      $region50: #{tpu_custom_call.1} parent=5 // pred_check_branch
        %308 = sbr.rel (%p305) target = $region52
      $region51: #{tpu_custom_call.1} parent=5 // pred_region
        %s309 = ssub.s32 %s17, 1
        %s310 = smul.u32 2, %s27
        %p311 = scmp.lt.s32.totalorder %s26, 1
        %s312 = scalar_select %p311, %s26, 1
        %p313 = scmp.lt.s32.totalorder %s310, 1
        %s314 = scalar_select %p313, %s310, 1
        %s315 = smul.addr %s314, 2
        %s316 = smul.addr %s312, 4
        %s317 = sadd.s32 %s315, %s316
        %s318 = smul.addr %s317, 4
        %s319 = scalar_lea.vmem %s0, %s318
        %p320 = pneg %p57
        %p321 = pneg %p54
        %s322 = smul.u32 2, %s27
        %p323 = scmp.lt.s32.totalorder %s26, 1
        %s324 = scalar_select %p323, %s26, 1
        %p325 = scmp.lt.s32.totalorder %s322, 1
        %s326 = scalar_select %p325, %s322, 1
        %s327 = smul.addr %s324, 2
        %s328 = sadd.s32 %s326, %s327
        %s329 = smul.addr %s328, 8
        %s330 = scalar_lea.vmem %s1, %s329
        %p331 = pneg %p85
        %p332 = pneg %p82
        %p333 = pneg %p106
        %p334 = pneg %p103
        %p335 = pneg %p127
        %p336 = pneg %p124
        %p337 = pneg %p148
        %p338 = pneg %p145
        %p339 = pneg %p169
        %p340 = pneg %p166
        %p341 = pneg %p190
        %p342 = pneg %p187
        %p343 = pneg %p211
        %p344 = pneg %p208
        %p345 = pneg %p239
        %p346 = pneg %p236
        %s347 = sand.u32 %s226, 1
        %s348 = scalar_lea.sflag [#allocation3], %s347
        %s349 = sand.u32 %s226, 1
        %s350 = smul.addr %s349, 16
        %s351 = scalar_lea.vmem [#allocation2], %s350
        %s352 = smul.u32 2, %s27
        %p353 = scmp.lt.s32.totalorder %s26, 1
        %s354 = scalar_select %p353, %s26, 1
        %p355 = scmp.lt.s32.totalorder %s352, 1
        %s356 = scalar_select %p355, %s352, 1
        %s357 = smul.addr %s356, 2
        %s358 = smul.addr %s354, 4
        %s359 = sadd.s32 %s357, %s358
        %s360 = smul.addr %s359, 4
        %s361 = scalar_lea.vmem %s0, %s360
        %s362 = smul.u32 2, %s27
        %s363 = smul.u32 2, %s27
        %p364 = scmp.lt.s32.totalorder %s26, 1
        %s365 = scalar_select %p364, %s26, 1
        %p366 = scmp.lt.s32.totalorder %s363, 1
        %s367 = scalar_select %p366, %s363, 1
        %s368 = smul.addr %s365, 2
        %s369 = sadd.s32 %s367, %s368
        %s370 = smul.addr %s369, 8
        %s371 = scalar_lea.vmem %s1, %s370
        %s372 = smul.u32 2, %s27
        %s373 = smul.u32 2, %s27
        %v375 = vld [vmem:[%s361] sm:$0xff]
        %v376 = vld [vmem:[%s361 + $0x8] sm:$0xff]
        %v377 = vld [vmem:[%s2] sm:$0xf]
        %v378 = vld [vmem:[%s2 + $0x4] sm:$0xf]
        %v379 = vld [vmem:[%s2 + $0x8] sm:$0xf]
        %v380 = vld [vmem:[%s2 + $0xc] sm:$0xf]
        %v381 = vld [vmem:[%s2 + $0x10] sm:$0xf]
        %v382 = vld [vmem:[%s2 + $0x14] sm:$0xf]
        %v383 = vld [vmem:[%s2 + $0x18] sm:$0xf]
        %v384 = vld [vmem:[%s2 + $0x1c] sm:$0xf]
        %v385 = vld [vmem:[%s2 + $0x20] sm:$0xf]
        %v386 = vld [vmem:[%s2 + $0x24] sm:$0xf]
        %v387 = vld [vmem:[%s2 + $0x28] sm:$0xf]
        %v388 = vld [vmem:[%s2 + $0x2c] sm:$0xf]
        %v389 = vld [vmem:[%s2 + $0x30] sm:$0xf]
        %v390 = vld [vmem:[%s2 + $0x34] sm:$0xf]
        %v391 = vld [vmem:[%s2 + $0x38] sm:$0xf]
        %v392 = vld [vmem:[%s2 + $0x3c] sm:$0xf]
        %v393 = vld [vmem:[%s2 + $0x40] sm:$0xf]
        %v394 = vld [vmem:[%s2 + $0x44] sm:$0xf]
        %v395 = vld [vmem:[%s3] sm:$0x1]
        %v397 = vlaneseq
        %v398 = vshrl.u32 %v397, 7
        %v399 = vsub.s32 0, %v398
        %v400 = vrot.slane %v395, %v399
        %v404 = vunpack.c.l.b16 %v375
        %v405 = vunpack.c.h.b16 %v375
        %v406 = vunpack.c.l.b16 %v376
        %v407 = vunpack.c.h.b16 %v376
        %v408 = vpack.c.b16 %v406, %v404
        %v409 = vpack.c.b16 %v407, %v405
        %v429 = vunpack.c.l.b16 %v377
        %v430 = vunpack.c.l.b16 %v378
        %v431 = vunpack.c.l.b16 %v379
        %v432 = vunpack.c.l.b16 %v380
        %v433 = vunpack.c.l.b16 %v381
        %v434 = vunpack.c.l.b16 %v382
        %v435 = vunpack.c.l.b16 %v383
        %v436 = vunpack.c.l.b16 %v384
        %v437 = vunpack.c.l.b16 %v385
        %v438 = vunpack.c.l.b16 %v386
        %v439 = vunpack.c.l.b16 %v387
        %v440 = vunpack.c.l.b16 %v388
        %v441 = vunpack.c.l.b16 %v389
        %v442 = vunpack.c.l.b16 %v390
        %v443 = vunpack.c.l.b16 %v391
        %v444 = vunpack.c.l.b16 %v392
        %v445 = vunpack.c.l.b16 %v393
        %v446 = vunpack.c.l.b16 %v394
        %v447 = vpack.c.b16 %v430, %v429
        %v448 = vpack.c.b16 %v432, %v431
        %v449 = vpack.c.b16 %v434, %v433
        %v450 = vpack.c.b16 %v436, %v435
        %v451 = vpack.c.b16 %v438, %v437
        %v452 = vpack.c.b16 %v440, %v439
        %v453 = vpack.c.b16 %v442, %v441
        %v454 = vpack.c.b16 %v444, %v443
        %v455 = vpack.c.b16 %v446, %v445
        %vm465 = vcmask 130048
        %v467 = vsel %vm465, %v409, 0
        %469 = vmatprep.subr.bf16.mxu0 0
        %470 = vmatpush1.bf16.msra.mxu0 %v454
        %471 = vmatprep.subr.bf16.mxu0 0
        %472 = vmatpush1.bf16.msra.mxu0 %v453
        %473 = vmatprep.subr.bf16.mxu0 0
        %474 = vmatpush1.bf16.msra.mxu0 %v452
        %475 = vmatprep.subr.bf16.mxu0 0
        %476 = vmatpush1.bf16.msra.mxu0 %v451
        %477 = vmatprep.subr.bf16.mxu0 0
        %478 = vmatpush1.bf16.msra.mxu0 %v450
        %479 = vmatprep.subr.bf16.mxu0 0
        %480 = vmatpush1.bf16.msra.mxu0 %v449
        %481 = vmatprep.subr.bf16.mxu0 0
        %482 = vmatpush1.bf16.msra.mxu0 %v448
        %483 = vmatprep.subr.bf16.mxu0 0
        %484 = vmatpush1.bf16.msra.mxu0 %v447
        %485 = vmatprep.subr.bf16.mxu0 0
        %486 = vmatpush2.bf16.msra.mxu0 0
        %487 = vmatprep.subr.bf16.mxu0 0
        %488 = vmatpush2.bf16.msra.mxu0 0
        %489 = vmatprep.subr.bf16.mxu0 0
        %490 = vmatpush2.bf16.msra.mxu0 0
        %491 = vmatprep.subr.bf16.mxu0 0
        %492 = vmatpush2.bf16.msra.mxu0 0
        %493 = vmatprep.subr.bf16.mxu0 0
        %494 = vmatpush2.bf16.msra.mxu0 0
        %495 = vmatprep.subr.bf16.mxu0 0
        %496 = vmatpush2.bf16.msra.mxu0 0
        %497 = vmatprep.subr.bf16.mxu0 0
        %498 = vmatpush2.bf16.msra.mxu0 0
        %499 = vmatprep.subr.bf16.mxu0 0
        %500 = vmatpush2.bf16.msra.mxu0 %v455
        %501 = vmatprep.mubr.bf16.mxu0 %v467
        %502 = vmatmul.mubr.bf16.gmra.mxu0 %v408
        %v503 = vpop.f32.mrf.mxu0
        %v504 = vadd.f32 %v400, %v503
        %v505 = vpop.f32.mrf.mxu0
        %v506 = vpop.f32.mrf.mxu0
        %v507 = vadd.f32 %v400, %v506
        %v508 = vpop.f32.mrf.mxu0
        %509 = vdwg.mxu0
        %v510 = vmax.f32 %v504, 0.0
        %v511 = vmax.f32 %v507, 0.0
        %v512 = vpack.c.bf16 %v511, %v510
        %v513 = vld [vmem:[%s4] sm:$0xf]
        %v514 = vld [vmem:[%s4 + $0x4] sm:$0xf]
        %v515 = vld [vmem:[%s4 + $0x8] sm:$0xf]
        %v516 = vld [vmem:[%s4 + $0xc] sm:$0xf]
        %v517 = vld [vmem:[%s5] sm:$0x1]
        %v519 = vlaneseq
        %v520 = vshrl.u32 %v519, 7
        %v521 = vsub.s32 0, %v520
        %v522 = vrot.slane %v517, %v521
        %v528 = vunpack.c.l.b16 %v513
        %v529 = vunpack.c.l.b16 %v514
        %v530 = vunpack.c.l.b16 %v515
        %v531 = vunpack.c.l.b16 %v516
        %v532 = vpack.c.b16 %v529, %v528
        %v533 = vpack.c.b16 %v531, %v530
        %vm536 = vcmask 261120
        %v538 = vsel %vm536, %v512, 0
        %540 = vmatprep.subr.bf16.mxu0 0
        %541 = vmatpush1.bf16.msra.mxu0 0
        %542 = vmatprep.subr.bf16.mxu0 0
        %543 = vmatpush1.bf16.msra.mxu0 0
        %544 = vmatprep.subr.bf16.mxu0 0
        %545 = vmatpush1.bf16.msra.mxu0 0
        %546 = vmatprep.subr.bf16.mxu0 0
        %547 = vmatpush1.bf16.msra.mxu0 0
        %548 = vmatprep.subr.bf16.mxu0 0
        %549 = vmatpush1.bf16.msra.mxu0 0
        %550 = vmatprep.subr.bf16.mxu0 0
        %551 = vmatpush1.bf16.msra.mxu0 0
        %552 = vmatprep.subr.bf16.mxu0 0
        %553 = vmatpush1.bf16.msra.mxu0 %v533
        %554 = vmatprep.subr.bf16.mxu0 0
        %555 = vmatpush1.bf16.msra.mxu0 %v532
        %556 = vmatprep.subr.bf16.mxu0 0
        %557 = vmatpush2.bf16.msra.mxu0 0
        %558 = vmatprep.subr.bf16.mxu0 0
        %559 = vmatpush2.bf16.msra.mxu0 0
        %560 = vmatprep.subr.bf16.mxu0 0
        %561 = vmatpush2.bf16.msra.mxu0 0
        %562 = vmatprep.subr.bf16.mxu0 0
        %563 = vmatpush2.bf16.msra.mxu0 0
        %564 = vmatprep.subr.bf16.mxu0 0
        %565 = vmatpush2.bf16.msra.mxu0 0
        %566 = vmatprep.subr.bf16.mxu0 0
        %567 = vmatpush2.bf16.msra.mxu0 0
        %568 = vmatprep.subr.bf16.mxu0 0
        %569 = vmatpush2.bf16.msra.mxu0 0
        %570 = vmatprep.subr.bf16.mxu0 0
        %571 = vmatpush2.bf16.msra.mxu0 0
        %572 = vmatprep.mubr.bf16.mxu0 0
        %573 = vmatmul.mubr.bf16.gmra.mxu0 %v538
        %v574 = vpop.f32.mrf.mxu0
        %v575 = vadd.f32 %v522, %v574
        %v576 = vpop.f32.mrf.mxu0
        %v577 = vpop.f32.mrf.mxu0
        %v578 = vadd.f32 %v522, %v577
        %v579 = vpop.f32.mrf.mxu0
        %580 = vdwg.mxu0
        %v581 = vld [vmem:[%s371] sm:$0xff]
        %v582 = vld [vmem:[%s371 + $0x8] sm:$0xff]
        %v583 = vadd.f32 %v575, %v581
        %v584 = vadd.f32 %v578, %v582
        %v585 = vsel %vm465, %v583, 0.0
        %586 = vadd.xlane.f32.xlu0 %v585
        %v587 = vpop.xlane.xlu0 %586
        %v588 = vsel %vm465, %v584, 0.0
        %589 = vadd.xlane.f32.xlu0 %v588
        %v590 = vpop.xlane.xlu0 %589
        %v591 = vrcp.pop 16.0
        %v592 = vmul.f32 %v587, %v591
        %v593 = vmul.f32 %v590, %v591
        %v594 = vsub.f32 %v583, %v592
        %v595 = vsub.f32 %v584, %v593
        %v596 = vmul.f32 %v594, %v594
        %v597 = vmul.f32 %v595, %v595
        %v598 = vsel %vm465, %v596, 0.0
        %599 = vadd.xlane.f32.xlu0 %v598
        %v600 = vpop.xlane.xlu0 %599
        %v601 = vsel %vm465, %v597, 0.0
        %602 = vadd.xlane.f32.xlu0 %v601
        %v603 = vpop.xlane.xlu0 %602
        %v604 = vmul.f32 %v600, %v591
        %v605 = vmul.f32 %v603, %v591
        %v606 = vadd.f32 %v604, 1e-05
        %v607 = vadd.f32 %v605, 1e-05
        %v608 = vrsqrt.pop %v606
        %v609 = vrsqrt.pop %v607
        %v610 = vmul.f32 %v594, %v608
        %v611 = vmul.f32 %v595, %v609
        %v612 = vld [vmem:[%s6] sm:$0x1]
        %v614 = vlaneseq
        %v615 = vshrl.u32 %v614, 7
        %v616 = vsub.s32 0, %v615
        %v617 = vrot.slane %v612, %v616
        %v619 = vmul.f32 %v610, %v617
        %v620 = vmul.f32 %v611, %v617
        %v621 = vld [vmem:[%s7] sm:$0x1]
        %v623 = vlaneseq
        %v624 = vshrl.u32 %v623, 7
        %v625 = vsub.s32 0, %v624
        %v626 = vrot.slane %v621, %v625
        %v628 = vadd.f32 %v619, %v626
        %v629 = vadd.f32 %v620, %v626
        %630 = vst.msk [vmem:[%s351] sm:$0xff] %vm465, %v628
        %631 = vst.msk [vmem:[%s351 + $0x8] sm:$0xff] %vm465, %v629
        %s632 = sand.u32 %s226, 1
        %s633 = scalar_lea.sflag [#allocation3], %s632
        %s634 = sand.u32 %s226, 1
        %s635 = smul.addr %s634, 16
        %s636 = scalar_lea.vmem [#allocation2], %s635
        // Predicated region
        $region53: #{tpu_custom_call.1} parent=51 // pred_check
          %p637 = pneg %p236
        $region54: #{tpu_custom_call.1} parent=51 // pred_check_branch
          %639 = sbr.rel (%p637) target = $region56
        $region55: #{tpu_custom_call.1} parent=51 // pred_region
          %s640 = smul.u32 2, %s27
          %s642 = ssub.s32 256, 256
          %643 = vsyncadd %s633, %s642
          %s644 = smul.addr %s26, 2
          %s645 = sadd.s32 %s640, %s644
          %s646 = smul.addr %s645, 128
          %s647 = scalar_lea.hbm %s8, %s646
          %s648 = sshll.u32 %s636, 4
          %s649 = int_to_ptr.vmem [resolvable:$true] %s648
          %654 = dma.vmem_to_hbm [thread:$0]  %s649, 256, %s647, %s633, 128, 128, 8
        $region56: #{tpu_custom_call.1} parent=51 // pred_fallthru
          _
      $region52: #{tpu_custom_call.1} parent=5 // pred_fallthru
        _
      %p655 = scmp.le.s32.totalorder 2, %s17
      // Predicated region
      $region57: #{tpu_custom_call.1} parent=5 // pred_check
        %p656 = pneg %p655
      $region58: #{tpu_custom_call.1} parent=5 // pred_check_branch
        %658 = sbr.rel (%p656) target = $region60
      $region59: #{tpu_custom_call.1} parent=5 // pred_region
        %s659 = ssub.s32 %s17, 2
        // Predicated region
        $region61: #{tpu_custom_call.1} parent=59 // pred_check
          %p660 = pneg %p242
        $region62: #{tpu_custom_call.1} parent=59 // pred_check_branch
          %662 = sbr.rel (%p660) target = $region64
        $region63: #{tpu_custom_call.1} parent=59 // pred_region
          %s663 = sand.u32 %s227, 1
          %s664 = scalar_lea.sflag [#allocation3], %s663
          %s665 = sand.u32 %s227, 1
          %s666 = smul.addr %s665, 16
          %s667 = scalar_lea.vmem [#allocation2], %s666
          %668 = dma.done %s664, 256
        $region64: #{tpu_custom_call.1} parent=59 // pred_fallthru
          _
      $region60: #{tpu_custom_call.1} parent=5 // pred_fallthru
        _
    $region6: #{tpu_custom_call.1} parent=1 // loop_footer
      %s21 = sadd.s32 1, %s17
    $region7: #{tpu_custom_call.1} parent=1 // loop_footer_branch
      %16 = sbr.rel target = $region3
    $region8: #{tpu_custom_call.1} parent=1 // loop_exit
      _
    %669 = vsyncpa [#allocation3], 1
    %s670 = scalar_lea.sflag [#allocation3], 1
    %671 = vsyncpa %s670, 1

</llo_original>
